<compile_context>
chip_gen: v7x
topology: tpu7x:2x2x1
jax: 0.10.0
libtpu: 0.0.40
codegen_flags: <defaults>
</compile_context>

<pallas_src>
import jax
import jax.numpy as jnp
from jax.experimental import pallas as pl
from jax.experimental.pallas import tpu as pltpu


def _identity_copy_kernel(x_ref, o_ref):
    # Pure pass-through on the current VMEM tile.
    o_ref[...] = x_ref[...]


def _choose_lane_dense_shape(total_elems):
    """Pick a (rows, lanes) factorization with lanes a multiple of 128."""
    for lanes in (512, 256, 128):
        if total_elems % lanes == 0:
            return total_elems // lanes, lanes
    return None


@jax.jit
def pallas_identity_smoke_test(x):
    """Stream x through VMEM as a lane-dense, aliased, tiled identity copy.

    This is NOT part of the module's forward (which has no compute); it only
    exists to validate the Pallas path on TPU.
    """
    total = x.size
    shp = _choose_lane_dense_shape(total)
    if shp is None:
        # TODO(synk): element count not a multiple of 128 — skip the smoke
        # kernel rather than emitting masked narrow stores.
        return x

    rows, lanes = shp
    x2d = x.reshape(rows, lanes)
    dtype_bytes = jnp.dtype(x2d.dtype).itemsize

    # Cap per-tile bytes (~2 MiB) so (in + out) x double-buffering stays far
    # below the 32 MiB scoped-VMEM default on all chips.
    max_tr = max(8, (2 * 1024 * 1024) // (lanes * dtype_bytes))
    max_tr -= max_tr % 8
    # Block rows must be a multiple of 8 OR equal to the full row extent.
    if rows <= max_tr:
        tr = rows
    else:
        tr = max_tr

    out2d = pl.pallas_call(
        _identity_copy_kernel,
        out_shape=jax.ShapeDtypeStruct((rows, lanes), x2d.dtype),
        grid_spec=pltpu.PrefetchScalarGridSpec(
            num_scalar_prefetch=0,
            grid=(pl.cdiv(rows, tr),),
            in_specs=[pl.BlockSpec((tr, lanes), lambda i: (i, 0))],
            out_specs=pl.BlockSpec((tr, lanes), lambda i: (i, 0)),
        ),
        compiler_params=pltpu.CompilerParams(
            dimension_semantics=("parallel",),
            vmem_limit_bytes=32 * 1024 * 1024,
        ),
        # No-copy identity: output buffer aliases the input buffer.
        input_output_aliases={0: 0},
    )(x2d)
    return out2d.reshape(x.shape)


class SelfAttentionTansferPallas:
    """JAX/Pallas port of maskrcnn_benchmark's self_Attention_Tansfer.

    The reference module registers no parameters and its forward() performs
    no computation: it returns an empty list.  __init__ only calls
    _freeze_backbone(freeze_at), a training-time requires_grad toggle that is
    a no-op for inference (and a no-op for freeze_at < 0).
    """

    def __init__(self, freeze_at: int = -1):
        self._freeze_backbone(freeze_at)

    def _freeze_backbone(self, freeze_at):
        if freeze_at < 0:
            return
        # TODO(synk): the reference would touch self.stem / self.layerN which
        # are never defined on this class; freezing is irrelevant in JAX
        # (no registered parameters), so this is intentionally a no-op.
        return

    def __call__(self, x):
        # Exactly matches the PyTorch forward: no device work, empty list.
        outputs = []
        return outputs


if __name__ == "__main__":
    key = jax.random.PRNGKey(0)
    # Small NCHW input consistent with a backbone feature map.
    x = jax.random.normal(key, (2, 4, 16, 16), dtype=jnp.float32)

    model = SelfAttentionTansferPallas(freeze_at=-1)
    outputs = model(x)

    # Forward semantics: an empty list of outputs, no work performed.
    assert isinstance(outputs, list) and len(outputs) == 0

    # Standalone Pallas smoke test (kernel runs once, result is checked).
    y = pallas_identity_smoke_test(x)
    y = jax.block_until_ready(y)
    assert y.shape == x.shape and y.dtype == x.dtype
    assert bool(jnp.allclose(y, x))

    print("KERNEL_OK")
</pallas_src>

<mosaic_0001>
module attributes {stable_mosaic.version = 11 : i64} {
  func.func @_identity_copy_kernel(%arg0: i32, %arg1: memref<4x512xf32, #tpu.memory_space<vmem>>, %arg2: memref<4x512xf32, #tpu.memory_space<vmem>>) attributes {dimension_semantics = [#tpu.dimension_semantics<parallel>], iteration_bounds = array<i64: 1>, scalar_prefetch = 0 : i64, scratch_operands = 0 : i64, tpu.core_type = #tpu.core_type<tc>, window_params = [{transform_indices = @transform_0, window_bounds = array<i64: 4, 512>}, {transform_indices = @transform_1, window_bounds = array<i64: 4, 512>}]} {
    %c0 = arith.constant 0 : index
    %c0_0 = arith.constant 0 : index
    %0 = vector.load %arg1[%c0, %c0_0] : memref<4x512xf32, #tpu.memory_space<vmem>>, vector<4x512xf32>
    %c0_1 = arith.constant 0 : index
    %c0_2 = arith.constant 0 : index
    %1 = vector.load %arg2[%c0_1, %c0_2] : memref<4x512xf32, #tpu.memory_space<vmem>>, vector<4x512xf32>
    tpu.vector_store %arg2[%c0_1, %c0_2], %0 {strides = array<i32>} : memref<4x512xf32, #tpu.memory_space<vmem>>, vector<4x512xf32>,
    return
  }
  func.func @transform_0(%arg0: i32) -> (i32, i32) {
    %c0_i32 = arith.constant 0 : i32
    %c0_i32_0 = arith.constant 0 : i32
    return %arg0, %c0_i32 : i32, i32
  }
  func.func @transform_1(%arg0: i32) -> (i32, i32) {
    %c0_i32 = arith.constant 0 : i32
    %c0_i32_0 = arith.constant 0 : i32
    return %arg0, %c0_i32 : i32, i32
  }
}

</mosaic_0001>

<llo_original>
// kernel: pallas_identity_smoke_test.1
$region0: #{pallas_identity_smoke_test.1}
  #allocation0 [shape = 'u32[]', space=smem, size = 0x4, offset = 0x4, fixed_abs, tag = 'smem constant byte address 0x4 - core index']
  #allocation1 [shape = 'u32[144,128]{1,0:T(1,128)}', space=vmem, size = 0x12000, scoped, tag = 'internal scratch']
  %s0 = inlined_call_operand.vmem [shape: f32[4,512], index: 0, kind: input, shape index: {}, may-alias: {0,1}]
  %s1 = inlined_call_operand.vmem [shape: f32[4,512], index: 1, kind: output, shape index: {}, may-alias: {0,1}]
  %s2 = sld [smem:[#allocation0]]
  $region14: #{pallas_identity_smoke_test.1} parent=0
    _
  %s4 = ssub.s32 1, %s2
  %s5 = scalar_select 0, %s4, %s2
  // Predicated region
  $region2: #{pallas_identity_smoke_test.1} parent=0 // pred_check
    _
  $region3: #{pallas_identity_smoke_test.1} parent=0 // pred_check_branch
    %7 = sbr.rel (0) target = $region5
  $region4: #{pallas_identity_smoke_test.1} parent=0 // pred_region
    _
  $region5: #{pallas_identity_smoke_test.1} parent=0 // pred_fallthru
    _
  %v8 = vld [vmem:[%s0] sm:$0xff]
  %v9 = vld [vmem:[%s0 + $0x8] sm:$0xff]
  %10 = vst [vmem:[%s1] sm:$0xff] %v8
  %11 = vst [vmem:[%s1 + $0x8] sm:$0xff] %v9
  // Predicated region
  $region6: #{pallas_identity_smoke_test.1} parent=0 // pred_check
    _
  $region7: #{pallas_identity_smoke_test.1} parent=0 // pred_check_branch
    %13 = sbr.rel (0) target = $region9
  $region8: #{pallas_identity_smoke_test.1} parent=0 // pred_region
    _
  $region9: #{pallas_identity_smoke_test.1} parent=0 // pred_fallthru
    _
  // Predicated region
  $region10: #{pallas_identity_smoke_test.1} parent=0 // pred_check
    _
  $region11: #{pallas_identity_smoke_test.1} parent=0 // pred_check_branch
    %15 = sbr.rel (0) target = $region13
  $region12: #{pallas_identity_smoke_test.1} parent=0 // pred_region
    _
  $region13: #{pallas_identity_smoke_test.1} parent=0 // pred_fallthru
    _

</llo_original>
